<compile_context>
chip_gen: v6e
topology: v6e:2x2x1
jax: 0.10.0
libtpu: 0.0.40
codegen_flags: <defaults>
</compile_context>

<pallas_src>
import jax
import jax.numpy as jnp
from jax.experimental import pallas as pl
from jax.experimental.pallas import tpu as pltpu

_LANE = 128
_TILE_CAP = 1024  # max batch rows per grid step


def _round_up(x, m):
    return ((x + m - 1) // m) * m


def _cdiv(a, b):
    return -(-a // b)


def _mlp_softmax_kernel(x_ref,
                        w1_ref, b1_ref,
                        w2_ref, b2_ref,
                        w3_ref, b3_ref,
                        w4_ref, b4_ref,
                        o_ref):
    # x arrives f32 (single HBM read); pack to bf16 in-kernel for the MXU.
    x = x_ref[...].astype(jnp.bfloat16)

    # hidden1 + relu (bf16 MXU operands, f32 accumulate, f32 elementwise)
    h = jnp.dot(x, w1_ref[...], preferred_element_type=jnp.float32)
    h = jnp.maximum(h + b1_ref[...], 0.0)
    # hidden2 + relu
    h = jnp.dot(h.astype(jnp.bfloat16), w2_ref[...],
                preferred_element_type=jnp.float32)
    h = jnp.maximum(h + b2_ref[...], 0.0)
    # hidden3 + relu
    h = jnp.dot(h.astype(jnp.bfloat16), w3_ref[...],
                preferred_element_type=jnp.float32)
    h = jnp.maximum(h + b3_ref[...], 0.0)

    # output layer: class dim lane-padded to 128 for the MXU / reductions;
    # pad-class bias = -1e30 -> exp() == 0, real-class softmax unchanged.
    logits = jnp.dot(h.astype(jnp.bfloat16), w4_ref[...],
                     preferred_element_type=jnp.float32)
    logits = logits + b4_ref[...]

    # numerically-stable softmax over the (padded) class axis
    m = jnp.max(logits, axis=-1, keepdims=True)
    e = jnp.exp(logits - m)
    denom = jnp.sum(e, axis=-1, keepdims=True)
    probs = e * pl.reciprocal(denom, approx=False)

    # compact store: only the O real class columns go back to HBM
    n_out = o_ref.shape[-1]
    o_ref[...] = probs[:, :n_out].astype(o_ref.dtype)


def prepare_params(params):
    """One-time conversion of f32 [in, out] params into kernel operands.

    Hoisted out of the per-call path: bf16 weight casts, class-lane padding of
    the output layer, and (1, n) bias reshapes happen once here instead of on
    every forward call.
    """
    (w1, b1), (w2, b2), (w3, b3), (w4, b4) = (
        params["hidden1"], params["hidden2"], params["hidden3"], params["out"])
    H3, O = w4.shape
    O_pad = _round_up(max(O, _LANE), _LANE)

    w4p = jnp.zeros((H3, O_pad), jnp.float32).at[:, :O].set(
        w4.astype(jnp.float32))
    b4p = jnp.full((O_pad,), -1e30, jnp.float32).at[:O].set(
        b4.astype(jnp.float32))

    return {
        "w1": w1.astype(jnp.bfloat16),
        "b1": b1.astype(jnp.float32).reshape(1, -1),
        "w2": w2.astype(jnp.bfloat16),
        "b2": b2.astype(jnp.float32).reshape(1, -1),
        "w3": w3.astype(jnp.bfloat16),
        "b3": b3.astype(jnp.float32).reshape(1, -1),
        "w4": w4p.astype(jnp.bfloat16),
        "b4": b4p.reshape(1, O_pad),
        "n_output": O,
    }


def _choose_batch_tile(B):
    # Padding-aware: pick the number of tiles first, then the smallest 8-row
    # aligned tile that covers B (avoids e.g. B=520 padding to 1024).
    n_tiles = max(1, _cdiv(B, _TILE_CAP))
    if B >= 1024:
        # v7x: guarantee >=2 grid steps so the "parallel" batch axis actually
        # shards across both TensorCores.
        n_tiles = max(n_tiles, 2)
    return max(8, _round_up(_cdiv(B, n_tiles), 8))


def dnn_forward(x, prepped, *, batch_tile=None):
    """x: [B, n_feature] float32.  prepped: output of prepare_params()."""
    B, F = x.shape
    H1 = prepped["w1"].shape[1]
    H2 = prepped["w2"].shape[1]
    H3 = prepped["w3"].shape[1]
    O_pad = prepped["w4"].shape[1]
    O = prepped["n_output"]

    if batch_tile is None:
        batch_tile = _choose_batch_tile(B)
    batch_tile = max(8, _round_up(int(batch_tile), 8))
    B_pad = _round_up(B, batch_tile)
    if B_pad != B:
        x = jnp.pad(x, ((0, B_pad - B), (0, 0)))

    grid = (B_pad // batch_tile,)

    def full(shape):
        # weights / biases: same full block every grid step (stay resident)
        return pl.BlockSpec(shape, lambda i: tuple(0 for _ in shape))

    # advisory cost hint for XLA scheduling around the custom call
    flops = 2 * B_pad * (F * H1 + H1 * H2 + H2 * H3 + H3 * O_pad)
    transcendentals = B_pad * (O_pad + 1)  # exp per logit + reciprocal per row
    bytes_accessed = (
        B_pad * F * 4                                            # x (f32 in)
        + (prepped["w1"].size + prepped["w2"].size
           + prepped["w3"].size + prepped["w4"].size) * 2        # bf16 weights
        + (prepped["b1"].size + prepped["b2"].size
           + prepped["b3"].size + prepped["b4"].size) * 4        # f32 biases
        + B_pad * O * 4)                                         # compact out

    out = pl.pallas_call(
        _mlp_softmax_kernel,
        out_shape=jax.ShapeDtypeStruct((B_pad, O), jnp.float32),
        grid=grid,
        in_specs=[
            pl.BlockSpec((batch_tile, F), lambda i: (i, 0)),
            full((F, H1)), full((1, H1)),
            full((H1, H2)), full((1, H2)),
            full((H2, H3)), full((1, H3)),
            full((H3, O_pad)), full((1, O_pad)),
        ],
        out_specs=pl.BlockSpec((batch_tile, O), lambda i: (i, 0)),
        compiler_params=pltpu.CompilerParams(
            dimension_semantics=("parallel",)),
        cost_estimate=pl.CostEstimate(
            flops=flops,
            transcendentals=transcendentals,
            bytes_accessed=bytes_accessed),
    )(x,
      prepped["w1"], prepped["b1"],
      prepped["w2"], prepped["b2"],
      prepped["w3"], prepped["b3"],
      prepped["w4"], prepped["b4"])

    # strip batch padding (class dim is already compact)
    return out[:B]


def init_params(key, n_feature, n_hidden1, n_hidden2, n_hidden3, n_output):
    """Deterministic synthetic init. Weights stored as [in, out]."""
    dims = [(n_feature, n_hidden1), (n_hidden1, n_hidden2),
            (n_hidden2, n_hidden3), (n_hidden3, n_output)]
    names = ["hidden1", "hidden2", "hidden3", "out"]
    params = {}
    for name, (fan_in, fan_out) in zip(names, dims):
        key, kw, kb = jax.random.split(key, 3)
        bound = 1.0 / jnp.sqrt(fan_in)  # matches torch.nn.Linear default init
        w = jax.random.uniform(kw, (fan_in, fan_out), jnp.float32, -bound, bound)
        b = jax.random.uniform(kb, (fan_out,), jnp.float32, -bound, bound)
        params[name] = (w, b)
    return params


if __name__ == "__main__":
    # small shapes consistent with the module's forward
    B, n_feature = 8, 32
    n_hidden1, n_hidden2, n_hidden3, n_output = 64, 64, 32, 8

    key = jax.random.PRNGKey(0)
    key, kx = jax.random.split(key)
    x = jax.random.normal(kx, (B, n_feature), jnp.float32)
    params = init_params(key, n_feature, n_hidden1, n_hidden2, n_hidden3,
                         n_output)

    # hoisted, one-time weight preparation (bf16 cast / pad / reshape)
    prepped = prepare_params(params)

    y = dnn_forward(x, prepped)
    y = jax.block_until_ready(y)

    # sanity: pure-JAX f32 reference (kernel uses bf16 MXU operands, so the
    # tolerance is loosened accordingly)
    def ref(x, p):
        h = jax.nn.relu(x @ p["hidden1"][0] + p["hidden1"][1])
        h = jax.nn.relu(h @ p["hidden2"][0] + p["hidden2"][1])
        h = jax.nn.relu(h @ p["hidden3"][0] + p["hidden3"][1])
        return jax.nn.softmax(h @ p["out"][0] + p["out"][1], axis=-1)

    y_ref = ref(x, params)
    assert y.shape == (B, n_output)
    assert jnp.allclose(jnp.sum(y, axis=-1), 1.0, atol=1e-3)
    assert jnp.allclose(y, y_ref, atol=2e-2)

    print("KERNEL_OK")
</pallas_src>

<mosaic_0001>
module attributes {stable_mosaic.version = 11 : i64} {
  func.func @_mlp_softmax_kernel(%arg0: i32, %arg1: memref<8x32xf32, #tpu.memory_space<vmem>>, %arg2: memref<32x64xbf16, #tpu.memory_space<vmem>>, %arg3: memref<1x64xf32, #tpu.memory_space<vmem>>, %arg4: memref<64x64xbf16, #tpu.memory_space<vmem>>, %arg5: memref<1x64xf32, #tpu.memory_space<vmem>>, %arg6: memref<64x32xbf16, #tpu.memory_space<vmem>>, %arg7: memref<1x32xf32, #tpu.memory_space<vmem>>, %arg8: memref<32x128xbf16, #tpu.memory_space<vmem>>, %arg9: memref<1x128xf32, #tpu.memory_space<vmem>>, %arg10: memref<8x8xf32, #tpu.memory_space<vmem>>) attributes {dimension_semantics = [#tpu.dimension_semantics<parallel>], iteration_bounds = array<i64: 1>, scalar_prefetch = 0 : i64, scratch_operands = 0 : i64, tpu.core_type = #tpu.core_type<tc>, window_params = [{transform_indices = @transform_0, window_bounds = array<i64: 8, 32>}, {pipeline_mode = #tpu.pipeline_mode<synchronous>, transform_indices = @transform_1, window_bounds = array<i64: 32, 64>}, {pipeline_mode = #tpu.pipeline_mode<synchronous>, transform_indices = @transform_2, window_bounds = array<i64: 1, 64>}, {pipeline_mode = #tpu.pipeline_mode<synchronous>, transform_indices = @transform_3, window_bounds = array<i64: 64, 64>}, {pipeline_mode = #tpu.pipeline_mode<synchronous>, transform_indices = @transform_4, window_bounds = array<i64: 1, 64>}, {pipeline_mode = #tpu.pipeline_mode<synchronous>, transform_indices = @transform_5, window_bounds = array<i64: 64, 32>}, {pipeline_mode = #tpu.pipeline_mode<synchronous>, transform_indices = @transform_6, window_bounds = array<i64: 1, 32>}, {pipeline_mode = #tpu.pipeline_mode<synchronous>, transform_indices = @transform_7, window_bounds = array<i64: 32, 128>}, {pipeline_mode = #tpu.pipeline_mode<synchronous>, transform_indices = @transform_8, window_bounds = array<i64: 1, 128>}, {transform_indices = @transform_9, window_bounds = array<i64: 8, 8>}]} {
    %c0 = arith.constant 0 : index
    %c0_0 = arith.constant 0 : index
    %0 = vector.load %arg1[%c0, %c0_0] : memref<8x32xf32, #tpu.memory_space<vmem>>, vector<8x32xf32>
    %1 = arith.truncf %0 : vector<8x32xf32> to vector<8x32xbf16>
    %c0_1 = arith.constant 0 : index
    %c0_2 = arith.constant 0 : index
    %2 = vector.load %arg2[%c0_1, %c0_2] : memref<32x64xbf16, #tpu.memory_space<vmem>>, vector<32x64xbf16>
    %cst = arith.constant dense<0.000000e+00> : vector<8x64xf32>
    %3 = tpu.matmul %1, %2, %cst {dimension_numbers = #tpu.dot_dimension_numbers<[1], [0], [0], [1], [0, 0, 1, 1], [], []>} : vector<8x32xbf16>, vector<32x64xbf16>, vector<8x64xf32> -> vector<8x64xf32>
    %c0_3 = arith.constant 0 : index
    %c0_4 = arith.constant 0 : index
    %4 = vector.load %arg3[%c0_3, %c0_4] : memref<1x64xf32, #tpu.memory_space<vmem>>, vector<1x64xf32>
    %5 = vector.broadcast %4 : vector<1x64xf32> to vector<8x64xf32>
    %6 = arith.addf %3, %5 : vector<8x64xf32>
    %cst_5 = arith.constant 0.000000e+00 : f32
    %7 = vector.broadcast %cst_5 : f32 to vector<8x64xf32>
    %8 = arith.maximumf %6, %7 : vector<8x64xf32>
    %9 = arith.truncf %8 : vector<8x64xf32> to vector<8x64xbf16>
    %c0_6 = arith.constant 0 : index
    %c0_7 = arith.constant 0 : index
    %10 = vector.load %arg4[%c0_6, %c0_7] : memref<64x64xbf16, #tpu.memory_space<vmem>>, vector<64x64xbf16>
    %cst_8 = arith.constant dense<0.000000e+00> : vector<8x64xf32>
    %11 = tpu.matmul %9, %10, %cst_8 {dimension_numbers = #tpu.dot_dimension_numbers<[1], [0], [0], [1], [0, 0, 1, 1], [], []>} : vector<8x64xbf16>, vector<64x64xbf16>, vector<8x64xf32> -> vector<8x64xf32>
    %c0_9 = arith.constant 0 : index
    %c0_10 = arith.constant 0 : index
    %12 = vector.load %arg5[%c0_9, %c0_10] : memref<1x64xf32, #tpu.memory_space<vmem>>, vector<1x64xf32>
    %13 = vector.broadcast %12 : vector<1x64xf32> to vector<8x64xf32>
    %14 = arith.addf %11, %13 : vector<8x64xf32>
    %cst_11 = arith.constant 0.000000e+00 : f32
    %15 = vector.broadcast %cst_11 : f32 to vector<8x64xf32>
    %16 = arith.maximumf %14, %15 : vector<8x64xf32>
    %17 = arith.truncf %16 : vector<8x64xf32> to vector<8x64xbf16>
    %c0_12 = arith.constant 0 : index
    %c0_13 = arith.constant 0 : index
    %18 = vector.load %arg6[%c0_12, %c0_13] : memref<64x32xbf16, #tpu.memory_space<vmem>>, vector<64x32xbf16>
    %cst_14 = arith.constant dense<0.000000e+00> : vector<8x32xf32>
    %19 = tpu.matmul %17, %18, %cst_14 {dimension_numbers = #tpu.dot_dimension_numbers<[1], [0], [0], [1], [0, 0, 1, 1], [], []>} : vector<8x64xbf16>, vector<64x32xbf16>, vector<8x32xf32> -> vector<8x32xf32>
    %c0_15 = arith.constant 0 : index
    %c0_16 = arith.constant 0 : index
    %20 = vector.load %arg7[%c0_15, %c0_16] : memref<1x32xf32, #tpu.memory_space<vmem>>, vector<1x32xf32>
    %21 = vector.broadcast %20 : vector<1x32xf32> to vector<8x32xf32>
    %22 = arith.addf %19, %21 : vector<8x32xf32>
    %cst_17 = arith.constant 0.000000e+00 : f32
    %23 = vector.broadcast %cst_17 : f32 to vector<8x32xf32>
    %24 = arith.maximumf %22, %23 : vector<8x32xf32>
    %25 = arith.truncf %24 : vector<8x32xf32> to vector<8x32xbf16>
    %c0_18 = arith.constant 0 : index
    %c0_19 = arith.constant 0 : index
    %26 = vector.load %arg8[%c0_18, %c0_19] : memref<32x128xbf16, #tpu.memory_space<vmem>>, vector<32x128xbf16>
    %cst_20 = arith.constant dense<0.000000e+00> : vector<8x128xf32>
    %27 = tpu.matmul %25, %26, %cst_20 {dimension_numbers = #tpu.dot_dimension_numbers<[1], [0], [0], [1], [0, 0, 1, 1], [], []>} : vector<8x32xbf16>, vector<32x128xbf16>, vector<8x128xf32> -> vector<8x128xf32>
    %c0_21 = arith.constant 0 : index
    %c0_22 = arith.constant 0 : index
    %28 = vector.load %arg9[%c0_21, %c0_22] : memref<1x128xf32, #tpu.memory_space<vmem>>, vector<1x128xf32>
    %29 = vector.broadcast %28 : vector<1x128xf32> to vector<8x128xf32>
    %30 = arith.addf %27, %29 : vector<8x128xf32>
    %cst_23 = arith.constant dense<0xFF800000> : vector<8xf32>
    %31 = vector.multi_reduction <maximumf>, %30, %cst_23 [1] : vector<8x128xf32> to vector<8xf32>
    %32 = vector.shape_cast %31 : vector<8xf32> to vector<8x1xf32>
    %33 = vector.broadcast %32 : vector<8x1xf32> to vector<8x128xf32>
    %34 = arith.subf %30, %33 : vector<8x128xf32>
    %35 = math.exp %34 : vector<8x128xf32>
    %cst_24 = arith.constant dense<0.000000e+00> : vector<8xf32>
    %36 = vector.multi_reduction <add>, %35, %cst_24 [1] : vector<8x128xf32> to vector<8xf32>
    %37 = vector.shape_cast %36 : vector<8xf32> to vector<8x1xf32>
    %38 = tpu.reciprocal %37 : vector<8x1xf32> -> vector<8x1xf32>
    %39 = vector.broadcast %38 : vector<8x1xf32> to vector<8x128xf32>
    %40 = arith.mulf %35, %39 : vector<8x128xf32>
    %41 = vector.extract_strided_slice %40 {offsets = [0, 0], sizes = [8, 8], strides = [1, 1]} : vector<8x128xf32> to vector<8x8xf32>
    %c0_25 = arith.constant 0 : index
    %c0_26 = arith.constant 0 : index
    %42 = vector.load %arg10[%c0_25, %c0_26] : memref<8x8xf32, #tpu.memory_space<vmem>>, vector<8x8xf32>
    tpu.vector_store %arg10[%c0_25, %c0_26], %41 {strides = array<i32>} : memref<8x8xf32, #tpu.memory_space<vmem>>, vector<8x8xf32>,
    return
  }
  func.func @transform_0(%arg0: i32) -> (i32, i32) {
    %c0_i32 = arith.constant 0 : i32
    %c0_i32_0 = arith.constant 0 : i32
    return %arg0, %c0_i32 : i32, i32
  }
  func.func @transform_1(%arg0: i32) -> (i32, i32) {
    %c0_i32 = arith.constant 0 : i32
    %c0_i32_0 = arith.constant 0 : i32
    %c0_i32_1 = arith.constant 0 : i32
    return %c0_i32, %c0_i32_0 : i32, i32
  }
  func.func @transform_2(%arg0: i32) -> (i32, i32) {
    %c0_i32 = arith.constant 0 : i32
    %c0_i32_0 = arith.constant 0 : i32
    %c0_i32_1 = arith.constant 0 : i32
    return %c0_i32, %c0_i32_0 : i32, i32
  }
  func.func @transform_3(%arg0: i32) -> (i32, i32) {
    %c0_i32 = arith.constant 0 : i32
    %c0_i32_0 = arith.constant 0 : i32
    %c0_i32_1 = arith.constant 0 : i32
    return %c0_i32, %c0_i32_0 : i32, i32
  }
  func.func @transform_4(%arg0: i32) -> (i32, i32) {
    %c0_i32 = arith.constant 0 : i32
    %c0_i32_0 = arith.constant 0 : i32
    %c0_i32_1 = arith.constant 0 : i32
    return %c0_i32, %c0_i32_0 : i32, i32
  }
  func.func @transform_5(%arg0: i32) -> (i32, i32) {
    %c0_i32 = arith.constant 0 : i32
    %c0_i32_0 = arith.constant 0 : i32
    %c0_i32_1 = arith.constant 0 : i32
    return %c0_i32, %c0_i32_0 : i32, i32
  }
  func.func @transform_6(%arg0: i32) -> (i32, i32) {
    %c0_i32 = arith.constant 0 : i32
    %c0_i32_0 = arith.constant 0 : i32
    %c0_i32_1 = arith.constant 0 : i32
    return %c0_i32, %c0_i32_0 : i32, i32
  }
  func.func @transform_7(%arg0: i32) -> (i32, i32) {
    %c0_i32 = arith.constant 0 : i32
    %c0_i32_0 = arith.constant 0 : i32
    %c0_i32_1 = arith.constant 0 : i32
    return %c0_i32, %c0_i32_0 : i32, i32
  }
  func.func @transform_8(%arg0: i32) -> (i32, i32) {
    %c0_i32 = arith.constant 0 : i32
    %c0_i32_0 = arith.constant 0 : i32
    %c0_i32_1 = arith.constant 0 : i32
    return %c0_i32, %c0_i32_0 : i32, i32
  }
  func.func @transform_9(%arg0: i32) -> (i32, i32) {
    %c0_i32 = arith.constant 0 : i32
    %c0_i32_0 = arith.constant 0 : i32
    return %arg0, %c0_i32 : i32, i32
  }
}

</mosaic_0001>

<llo_original>
// kernel: tpu_custom_call.1
$region0: #{tpu_custom_call.1}
  #allocation0 [shape = 'u32[]', space=smem, size = 0x4, offset = 0x4, fixed_abs, tag = 'smem constant byte address 0x4 - core index']
  #allocation1 [shape = 'u32[144,128]{1,0:T(1,128)}', space=vmem, size = 0x12000, scoped, tag = 'internal scratch']
  %s0 = inlined_call_operand.hbm [shape: f32[8,32], index: 0, kind: input, shape index: {}]
  %s1 = inlined_call_operand.vmem [shape: bf16[32,64], index: 1, kind: input, shape index: {}]
  %s2 = inlined_call_operand.vmem [shape: f32[1,64], index: 2, kind: input, shape index: {}]
  %s3 = inlined_call_operand.vmem [shape: bf16[64,64], index: 3, kind: input, shape index: {}]
  %s4 = inlined_call_operand.vmem [shape: f32[1,64], index: 4, kind: input, shape index: {}]
  %s5 = inlined_call_operand.vmem [shape: bf16[64,32], index: 5, kind: input, shape index: {}]
  %s6 = inlined_call_operand.vmem [shape: f32[1,32], index: 6, kind: input, shape index: {}]
  %s7 = inlined_call_operand.hbm [shape: bf16[32,128], index: 7, kind: input, shape index: {}]
  %s8 = inlined_call_operand.vmem [shape: f32[1,128], index: 8, kind: input, shape index: {}]
  %s9 = inlined_call_operand.hbm [shape: f32[8,8], index: 9, kind: output, shape index: {}]
  %s10 = sld [smem:[#allocation0]]
  $region54: #{tpu_custom_call.1} parent=0
    _
  %s12 = ssub.s32 1, %s10
  %s13 = scalar_select 0, %s12, %s10
  $region1: #{tpu_custom_call.1} parent=0
    #allocation2 [shape = 'u8[4096]{0}', space=vmem, size = 0x1000, scoped, tag = 'input window, operand 0, single buffered']
    #allocation3 [shape = 's32[1]{0}', space=sflag, size = 0x4, scoped, tag = 'scoped memory for tpu_custom_call.1']
    #allocation4 [shape = 's32[1]{0}', space=sflag, size = 0x4, scoped, tag = 'scoped memory for tpu_custom_call.1']
    #allocation5 [shape = 'u8[8192]{0}', space=vmem, size = 0x2000, scoped, tag = 'input window, operand 7, single buffered']
    #allocation6 [shape = 's32[1]{0}', space=sflag, size = 0x4, scoped, tag = 'scoped memory for tpu_custom_call.1']
    #allocation7 [shape = 'u8[4096]{0}', space=vmem, size = 0x1000, scoped, tag = 'output window, operand 0, single buffered']
    %14 = vsyncpa [#allocation3], 0
    %15 = vsyncpa [#allocation6], 0
    %16 = vsyncpa [#allocation4], 0
    // Predicated region
    $region2: #{tpu_custom_call.1} parent=1 // pred_check
      _
    $region3: #{tpu_custom_call.1} parent=1 // pred_check_branch
      %18 = sbr.rel (0) target = $region5
    $region4: #{tpu_custom_call.1} parent=1 // pred_region
      %s20 = ssub.s32 128, 128
      %21 = vsyncadd [#allocation3], %s20
      %s23 = sshll.u32 [#allocation2], 4
      %s24 = int_to_ptr.vmem [resolvable:$true] %s23
      %26 = dma.hbm_to_vmem [thread:$0]  %s0, 128, %s24, [#allocation3]
    $region5: #{tpu_custom_call.1} parent=1 // pred_fallthru
      _
    // Predicated region
    $region6: #{tpu_custom_call.1} parent=1 // pred_check
      _
    $region7: #{tpu_custom_call.1} parent=1 // pred_check_branch
      %28 = sbr.rel (0) target = $region9
    $region8: #{tpu_custom_call.1} parent=1 // pred_region
      _
    $region9: #{tpu_custom_call.1} parent=1 // pred_fallthru
      _
    // Predicated region
    $region10: #{tpu_custom_call.1} parent=1 // pred_check
      _
    $region11: #{tpu_custom_call.1} parent=1 // pred_check_branch
      %30 = sbr.rel (0) target = $region13
    $region12: #{tpu_custom_call.1} parent=1 // pred_region
      _
    $region13: #{tpu_custom_call.1} parent=1 // pred_fallthru
      _
    // Predicated region
    $region14: #{tpu_custom_call.1} parent=1 // pred_check
      _
    $region15: #{tpu_custom_call.1} parent=1 // pred_check_branch
      %32 = sbr.rel (0) target = $region17
    $region16: #{tpu_custom_call.1} parent=1 // pred_region
      _
    $region17: #{tpu_custom_call.1} parent=1 // pred_fallthru
      _
    // Predicated region
    $region18: #{tpu_custom_call.1} parent=1 // pred_check
      _
    $region19: #{tpu_custom_call.1} parent=1 // pred_check_branch
      %34 = sbr.rel (0) target = $region21
    $region20: #{tpu_custom_call.1} parent=1 // pred_region
      _
    $region21: #{tpu_custom_call.1} parent=1 // pred_fallthru
      _
    // Predicated region
    $region22: #{tpu_custom_call.1} parent=1 // pred_check
      _
    $region23: #{tpu_custom_call.1} parent=1 // pred_check_branch
      %36 = sbr.rel (0) target = $region25
    $region24: #{tpu_custom_call.1} parent=1 // pred_region
      _
    $region25: #{tpu_custom_call.1} parent=1 // pred_fallthru
      _
    // Predicated region
    $region26: #{tpu_custom_call.1} parent=1 // pred_check
      _
    $region27: #{tpu_custom_call.1} parent=1 // pred_check_branch
      %38 = sbr.rel (0) target = $region29
    $region28: #{tpu_custom_call.1} parent=1 // pred_region
      _
    $region29: #{tpu_custom_call.1} parent=1 // pred_fallthru
      _
    // Predicated region
    $region30: #{tpu_custom_call.1} parent=1 // pred_check
      _
    $region31: #{tpu_custom_call.1} parent=1 // pred_check_branch
      %40 = sbr.rel (0) target = $region33
    $region32: #{tpu_custom_call.1} parent=1 // pred_region
      %s42 = ssub.s32 256, 256
      %43 = vsyncadd [#allocation6], %s42
      %s44 = sshll.u32 [#allocation5], 4
      %s45 = int_to_ptr.vmem [resolvable:$true] %s44
      %50 = dma.hbm_to_vmem [thread:$0]  %s7, 256, %s45, [#allocation6], 64, 64, 4
    $region33: #{tpu_custom_call.1} parent=1 // pred_fallthru
      _
    // Predicated region
    $region34: #{tpu_custom_call.1} parent=1 // pred_check
      _
    $region35: #{tpu_custom_call.1} parent=1 // pred_check_branch
      %52 = sbr.rel (0) target = $region37
    $region36: #{tpu_custom_call.1} parent=1 // pred_region
      _
    $region37: #{tpu_custom_call.1} parent=1 // pred_fallthru
      _
    // Predicated region
    $region38: #{tpu_custom_call.1} parent=1 // pred_check
      _
    $region39: #{tpu_custom_call.1} parent=1 // pred_check_branch
      %54 = sbr.rel (0) target = $region41
    $region40: #{tpu_custom_call.1} parent=1 // pred_region
      %55 = dma.done [#allocation3], 128
    $region41: #{tpu_custom_call.1} parent=1 // pred_fallthru
      _
    // Predicated region
    $region42: #{tpu_custom_call.1} parent=1 // pred_check
      _
    $region43: #{tpu_custom_call.1} parent=1 // pred_check_branch
      %57 = sbr.rel (0) target = $region45
    $region44: #{tpu_custom_call.1} parent=1 // pred_region
      %58 = dma.done [#allocation6], 256
    $region45: #{tpu_custom_call.1} parent=1 // pred_fallthru
      _
    %v60 = vld [vmem:[#allocation2] sm:$0xff]
    %v61 = vpack.c.bf16 %v60, %v60
    %v62 = vld [vmem:[%s1] sm:$0xf]
    %v63 = vld [vmem:[%s1 + $0x4] sm:$0xf]
    %v64 = vld [vmem:[%s1 + $0x8] sm:$0xf]
    %v65 = vld [vmem:[%s1 + $0xc] sm:$0xf]
    %v66 = vld [vmem:[%s2] sm:$0x1]
    %v68 = vlaneseq
    %v69 = vshrl.u32 %v68, 7
    %v70 = vsub.s32 0, %v69
    %v71 = vrot.slane %v66, %v70
    %v77 = vunpack.c.l.b16 %v62
    %v78 = vunpack.c.l.b16 %v63
    %v79 = vunpack.c.l.b16 %v64
    %v80 = vunpack.c.l.b16 %v65
    %v81 = vpack.c.b16 %v78, %v77
    %v82 = vpack.c.b16 %v80, %v79
    %vm85 = vcmask 261120
    %v87 = vsel %vm85, %v61, 0
    %89 = vmatprep.subr.bf16.mxu0 0
    %90 = vmatpush1.bf16.msra.mxu0 0
    %91 = vmatprep.subr.bf16.mxu0 0
    %92 = vmatpush1.bf16.msra.mxu0 0
    %93 = vmatprep.subr.bf16.mxu0 0
    %94 = vmatpush1.bf16.msra.mxu0 0
    %95 = vmatprep.subr.bf16.mxu0 0
    %96 = vmatpush1.bf16.msra.mxu0 0
    %97 = vmatprep.subr.bf16.mxu0 0
    %98 = vmatpush1.bf16.msra.mxu0 0
    %99 = vmatprep.subr.bf16.mxu0 0
    %100 = vmatpush1.bf16.msra.mxu0 0
    %101 = vmatprep.subr.bf16.mxu0 0
    %102 = vmatpush1.bf16.msra.mxu0 %v82
    %103 = vmatprep.subr.bf16.mxu0 0
    %104 = vmatpush1.bf16.msra.mxu0 %v81
    %105 = vmatprep.subr.bf16.mxu0 0
    %106 = vmatpush2.bf16.msra.mxu0 0
    %107 = vmatprep.subr.bf16.mxu0 0
    %108 = vmatpush2.bf16.msra.mxu0 0
    %109 = vmatprep.subr.bf16.mxu0 0
    %110 = vmatpush2.bf16.msra.mxu0 0
    %111 = vmatprep.subr.bf16.mxu0 0
    %112 = vmatpush2.bf16.msra.mxu0 0
    %113 = vmatprep.subr.bf16.mxu0 0
    %114 = vmatpush2.bf16.msra.mxu0 0
    %115 = vmatprep.subr.bf16.mxu0 0
    %116 = vmatpush2.bf16.msra.mxu0 0
    %117 = vmatprep.subr.bf16.mxu0 0
    %118 = vmatpush2.bf16.msra.mxu0 0
    %119 = vmatprep.subr.bf16.mxu0 0
    %120 = vmatpush2.bf16.msra.mxu0 0
    %121 = vmatprep.mubr.bf16.mxu0 0
    %122 = vmatmul.mubr.bf16.gmra.mxu0 %v87
    %v123 = vpop.f32.mrf.mxu0
    %v124 = vadd.f32 %v71, %v123
    %v125 = vpop.f32.mrf.mxu0
    %v126 = vpop.f32.mrf.mxu0
    %v127 = vpop.f32.mrf.mxu0
    %128 = vdwg.mxu0
    %v129 = vmax.f32 %v124, 0.0
    %v130 = vpack.c.bf16 %v129, %v129
    %v131 = vld [vmem:[%s3] sm:$0xf]
    %v132 = vld [vmem:[%s3 + $0x4] sm:$0xf]
    %v133 = vld [vmem:[%s3 + $0x8] sm:$0xf]
    %v134 = vld [vmem:[%s3 + $0xc] sm:$0xf]
    %v135 = vld [vmem:[%s3 + $0x10] sm:$0xf]
    %v136 = vld [vmem:[%s3 + $0x14] sm:$0xf]
    %v137 = vld [vmem:[%s3 + $0x18] sm:$0xf]
    %v138 = vld [vmem:[%s3 + $0x1c] sm:$0xf]
    %v139 = vld [vmem:[%s4] sm:$0x1]
    %v141 = vlaneseq
    %v142 = vshrl.u32 %v141, 7
    %v143 = vsub.s32 0, %v142
    %v144 = vrot.slane %v139, %v143
    %v154 = vunpack.c.l.b16 %v131
    %v155 = vunpack.c.l.b16 %v132
    %v156 = vunpack.c.l.b16 %v133
    %v157 = vunpack.c.l.b16 %v134
    %v158 = vunpack.c.l.b16 %v135
    %v159 = vunpack.c.l.b16 %v136
    %v160 = vunpack.c.l.b16 %v137
    %v161 = vunpack.c.l.b16 %v138
    %v162 = vpack.c.b16 %v155, %v154
    %v163 = vpack.c.b16 %v157, %v156
    %v164 = vpack.c.b16 %v159, %v158
    %v165 = vpack.c.b16 %v161, %v160
    %vm170 = vcmask 523264
    %v172 = vsel %vm170, %v130, 0
    %174 = vmatprep.subr.bf16.mxu0 0
    %175 = vmatpush1.bf16.msra.mxu0 0
    %176 = vmatprep.subr.bf16.mxu0 0
    %177 = vmatpush1.bf16.msra.mxu0 0
    %178 = vmatprep.subr.bf16.mxu0 0
    %179 = vmatpush1.bf16.msra.mxu0 0
    %180 = vmatprep.subr.bf16.mxu0 0
    %181 = vmatpush1.bf16.msra.mxu0 0
    %182 = vmatprep.subr.bf16.mxu0 0
    %183 = vmatpush1.bf16.msra.mxu0 %v165
    %184 = vmatprep.subr.bf16.mxu0 0
    %185 = vmatpush1.bf16.msra.mxu0 %v164
    %186 = vmatprep.subr.bf16.mxu0 0
    %187 = vmatpush1.bf16.msra.mxu0 %v163
    %188 = vmatprep.subr.bf16.mxu0 0
    %189 = vmatpush1.bf16.msra.mxu0 %v162
    %190 = vmatprep.subr.bf16.mxu0 0
    %191 = vmatpush2.bf16.msra.mxu0 0
    %192 = vmatprep.subr.bf16.mxu0 0
    %193 = vmatpush2.bf16.msra.mxu0 0
    %194 = vmatprep.subr.bf16.mxu0 0
    %195 = vmatpush2.bf16.msra.mxu0 0
    %196 = vmatprep.subr.bf16.mxu0 0
    %197 = vmatpush2.bf16.msra.mxu0 0
    %198 = vmatprep.subr.bf16.mxu0 0
    %199 = vmatpush2.bf16.msra.mxu0 0
    %200 = vmatprep.subr.bf16.mxu0 0
    %201 = vmatpush2.bf16.msra.mxu0 0
    %202 = vmatprep.subr.bf16.mxu0 0
    %203 = vmatpush2.bf16.msra.mxu0 0
    %204 = vmatprep.subr.bf16.mxu0 0
    %205 = vmatpush2.bf16.msra.mxu0 0
    %206 = vmatprep.mubr.bf16.mxu0 0
    %207 = vmatmul.mubr.bf16.gmra.mxu0 %v172
    %v208 = vpop.f32.mrf.mxu0
    %v209 = vadd.f32 %v144, %v208
    %v210 = vpop.f32.mrf.mxu0
    %v211 = vpop.f32.mrf.mxu0
    %v212 = vpop.f32.mrf.mxu0
    %213 = vdwg.mxu0
    %v214 = vmax.f32 %v209, 0.0
    %v215 = vpack.c.bf16 %v214, %v214
    %v216 = vld [vmem:[%s5] sm:$0xf]
    %v217 = vld [vmem:[%s5 + $0x4] sm:$0xf]
    %v218 = vld [vmem:[%s5 + $0x8] sm:$0xf]
    %v219 = vld [vmem:[%s5 + $0xc] sm:$0xf]
    %v220 = vld [vmem:[%s5 + $0x10] sm:$0xf]
    %v221 = vld [vmem:[%s5 + $0x14] sm:$0xf]
    %v222 = vld [vmem:[%s5 + $0x18] sm:$0xf]
    %v223 = vld [vmem:[%s5 + $0x1c] sm:$0xf]
    %v224 = vld [vmem:[%s6] sm:$0x1]
    %v226 = vlaneseq
    %v227 = vshrl.u32 %v226, 7
    %v228 = vsub.s32 0, %v227
    %v229 = vrot.slane %v224, %v228
    %v239 = vunpack.c.l.b16 %v216
    %v240 = vunpack.c.l.b16 %v217
    %v241 = vunpack.c.l.b16 %v218
    %v242 = vunpack.c.l.b16 %v219
    %v243 = vunpack.c.l.b16 %v220
    %v244 = vunpack.c.l.b16 %v221
    %v245 = vunpack.c.l.b16 %v222
    %v246 = vunpack.c.l.b16 %v223
    %v247 = vpack.c.b16 %v240, %v239
    %v248 = vpack.c.b16 %v242, %v241
    %v249 = vpack.c.b16 %v244, %v243
    %v250 = vpack.c.b16 %v246, %v245
    %v256 = vsel %vm170, %v215, 0
    %258 = vmatprep.subr.bf16.mxu0 0
    %259 = vmatpush1.bf16.msra.mxu0 0
    %260 = vmatprep.subr.bf16.mxu0 0
    %261 = vmatpush1.bf16.msra.mxu0 0
    %262 = vmatprep.subr.bf16.mxu0 0
    %263 = vmatpush1.bf16.msra.mxu0 0
    %264 = vmatprep.subr.bf16.mxu0 0
    %265 = vmatpush1.bf16.msra.mxu0 0
    %266 = vmatprep.subr.bf16.mxu0 0
    %267 = vmatpush1.bf16.msra.mxu0 %v250
    %268 = vmatprep.subr.bf16.mxu0 0
    %269 = vmatpush1.bf16.msra.mxu0 %v249
    %270 = vmatprep.subr.bf16.mxu0 0
    %271 = vmatpush1.bf16.msra.mxu0 %v248
    %272 = vmatprep.subr.bf16.mxu0 0
    %273 = vmatpush1.bf16.msra.mxu0 %v247
    %274 = vmatprep.subr.bf16.mxu0 0
    %275 = vmatpush2.bf16.msra.mxu0 0
    %276 = vmatprep.subr.bf16.mxu0 0
    %277 = vmatpush2.bf16.msra.mxu0 0
    %278 = vmatprep.subr.bf16.mxu0 0
    %279 = vmatpush2.bf16.msra.mxu0 0
    %280 = vmatprep.subr.bf16.mxu0 0
    %281 = vmatpush2.bf16.msra.mxu0 0
    %282 = vmatprep.subr.bf16.mxu0 0
    %283 = vmatpush2.bf16.msra.mxu0 0
    %284 = vmatprep.subr.bf16.mxu0 0
    %285 = vmatpush2.bf16.msra.mxu0 0
    %286 = vmatprep.subr.bf16.mxu0 0
    %287 = vmatpush2.bf16.msra.mxu0 0
    %288 = vmatprep.subr.bf16.mxu0 0
    %289 = vmatpush2.bf16.msra.mxu0 0
    %290 = vmatprep.mubr.bf16.mxu0 0
    %291 = vmatmul.mubr.bf16.gmra.mxu0 %v256
    %v292 = vpop.f32.mrf.mxu0
    %v293 = vadd.f32 %v229, %v292
    %v294 = vpop.f32.mrf.mxu0
    %v295 = vpop.f32.mrf.mxu0
    %v296 = vpop.f32.mrf.mxu0
    %297 = vdwg.mxu0
    %v298 = vmax.f32 %v293, 0.0
    %v299 = vpack.c.bf16 %v298, %v298
    %v300 = vld [vmem:[#allocation5] sm:$0xf]
    %v301 = vld [vmem:[#allocation5 + $0x4] sm:$0xf]
    %v302 = vld [vmem:[#allocation5 + $0x8] sm:$0xf]
    %v303 = vld [vmem:[#allocation5 + $0xc] sm:$0xf]
    %v304 = vld [vmem:[%s8] sm:$0x1]
    %v306 = vlaneseq
    %v307 = vshrl.u32 %v306, 7
    %v308 = vsub.s32 0, %v307
    %v309 = vrot.slane %v304, %v308
    %v315 = vunpack.c.l.b16 %v300
    %v316 = vunpack.c.l.b16 %v301
    %v317 = vunpack.c.l.b16 %v302
    %v318 = vunpack.c.l.b16 %v303
    %v319 = vpack.c.b16 %v316, %v315
    %v320 = vpack.c.b16 %v318, %v317
    %v324 = vsel %vm85, %v299, 0
    %326 = vmatprep.subr.bf16.mxu0 0
    %327 = vmatpush1.bf16.msra.mxu0 0
    %328 = vmatprep.subr.bf16.mxu0 0
    %329 = vmatpush1.bf16.msra.mxu0 0
    %330 = vmatprep.subr.bf16.mxu0 0
    %331 = vmatpush1.bf16.msra.mxu0 0
    %332 = vmatprep.subr.bf16.mxu0 0
    %333 = vmatpush1.bf16.msra.mxu0 0
    %334 = vmatprep.subr.bf16.mxu0 0
    %335 = vmatpush1.bf16.msra.mxu0 0
    %336 = vmatprep.subr.bf16.mxu0 0
    %337 = vmatpush1.bf16.msra.mxu0 0
    %338 = vmatprep.subr.bf16.mxu0 0
    %339 = vmatpush1.bf16.msra.mxu0 %v320
    %340 = vmatprep.subr.bf16.mxu0 0
    %341 = vmatpush1.bf16.msra.mxu0 %v319
    %342 = vmatprep.subr.bf16.mxu0 0
    %343 = vmatpush2.bf16.msra.mxu0 0
    %344 = vmatprep.subr.bf16.mxu0 0
    %345 = vmatpush2.bf16.msra.mxu0 0
    %346 = vmatprep.subr.bf16.mxu0 0
    %347 = vmatpush2.bf16.msra.mxu0 0
    %348 = vmatprep.subr.bf16.mxu0 0
    %349 = vmatpush2.bf16.msra.mxu0 0
    %350 = vmatprep.subr.bf16.mxu0 0
    %351 = vmatpush2.bf16.msra.mxu0 0
    %352 = vmatprep.subr.bf16.mxu0 0
    %353 = vmatpush2.bf16.msra.mxu0 0
    %354 = vmatprep.subr.bf16.mxu0 0
    %355 = vmatpush2.bf16.msra.mxu0 0
    %356 = vmatprep.subr.bf16.mxu0 0
    %357 = vmatpush2.bf16.msra.mxu0 0
    %358 = vmatprep.mubr.bf16.mxu0 0
    %359 = vmatmul.mubr.bf16.gmra.mxu0 %v324
    %v360 = vpop.f32.mrf.mxu0
    %v361 = vadd.f32 %v309, %v360
    %v362 = vpop.f32.mrf.mxu0
    %v363 = vpop.f32.mrf.mxu0
    %v364 = vpop.f32.mrf.mxu0
    %365 = vdwg.mxu0
    %366 = vmax.xlane.f32.xlu0 %v361
    %v367 = vpop.xlane.xlu0 %366
    %v368 = vsub.f32 %v361, %v367
    %v369 = vmul.f32 %v368, 1.442695
    %v370 = vpow.pop %v369
    %371 = vadd.xlane.f32.xlu0 %v370
    %v372 = vpop.xlane.xlu0 %371
    %v373 = vrcp.pop %v372
    %v374 = vmul.f32 %v370, %v373
    %vm375 = vcmask 64512
    %376 = vst.msk [vmem:[#allocation7] sm:$0xff] %vm375, %v374
    // Predicated region
    $region46: #{tpu_custom_call.1} parent=1 // pred_check
      _
    $region47: #{tpu_custom_call.1} parent=1 // pred_check_branch
      %378 = sbr.rel (0) target = $region49
    $region48: #{tpu_custom_call.1} parent=1 // pred_region
      %s380 = ssub.s32 128, 128
      %381 = vsyncadd [#allocation4], %s380
      %s383 = sshll.u32 [#allocation7], 4
      %s384 = int_to_ptr.vmem [resolvable:$true] %s383
      %386 = dma.vmem_to_hbm [thread:$0]  %s384, 128, %s9, [#allocation4]
    $region49: #{tpu_custom_call.1} parent=1 // pred_fallthru
      _
    // Predicated region
    $region50: #{tpu_custom_call.1} parent=1 // pred_check
      _
    $region51: #{tpu_custom_call.1} parent=1 // pred_check_branch
      %388 = sbr.rel (0) target = $region53
    $region52: #{tpu_custom_call.1} parent=1 // pred_region
      %389 = dma.done [#allocation4], 128
    $region53: #{tpu_custom_call.1} parent=1 // pred_fallthru
      _
    %390 = vsyncpa [#allocation3], 1
    %391 = vsyncpa [#allocation6], 1
    %392 = vsyncpa [#allocation4], 1

</llo_original>
